<compile_context>
chip_gen: v7x
topology: tpu7x:2x2x1
jax: 0.10.0
libtpu: 0.0.40
codegen_flags: <defaults>
</compile_context>

<pallas_src>
import functools

import jax
import jax.numpy as jnp
from jax import lax
from jax.experimental import pallas as pl
from jax.experimental.pallas import tpu as pltpu

_BN_EPS = 1e-5


def _round_up(x, m):
    return ((x + m - 1) // m) * m


# ---------------------------------------------------------------------------
# Kernel 1: global-batch BatchNorm statistics (sum / sum-of-squares reduction).
# Output blocks are VMEM-resident across the batch-tile axis (accumulator).
# ---------------------------------------------------------------------------
def _bn_stats_kernel(state_ref, sum_ref, sumsq_ref):
    @pl.when(pl.program_id(0) == 0)
    def _():
        sum_ref[...] = jnp.zeros_like(sum_ref)
        sumsq_ref[...] = jnp.zeros_like(sumsq_ref)

    s = state_ref[...]                                   # [T, S] f32
    sum_ref[...] += jnp.sum(s, axis=0, keepdims=True)
    sumsq_ref[...] += jnp.sum(s * s, axis=0, keepdims=True)


# ---------------------------------------------------------------------------
# Kernel 2: folded BatchNorm + 5-layer MLP, batch-tiled. Weights are bf16,
# matmuls accumulate in f32 on the MXU; BN fold / bias / ReLU stay f32 (VPU).
# fc5 (N=1) is a VPU multiply + XLU lane reduction in f32 (no MXU pass).
# ---------------------------------------------------------------------------
def _critic_mlp_kernel(state_ref, action_ref, ssum_ref, ssq_ref,
                       gamma_ref, beta_ref,
                       w1s_ref, w1a_ref, b1_ref,
                       w2_ref, b2_ref,
                       w3_ref, b3_ref,
                       w4_ref, b4_ref,
                       w5_ref, b5_ref,
                       out_ref, *, inv_b):
    # Fold global-batch BN into one scale/shift fma (computed from the stats
    # kernel's sums; ~6 VPU ops + 1 EUP rsqrt over S lanes per tile).
    mean = ssum_ref[...] * inv_b
    var = jnp.maximum(ssq_ref[...] * inv_b - mean * mean, 0.0)   # clamp: one-pass var
    scale = gamma_ref[...] * lax.rsqrt(var + _BN_EPS)
    shift = beta_ref[...] - mean * scale

    s_bn = (state_ref[...] * scale + shift).astype(jnp.bfloat16)
    a = action_ref[...].astype(jnp.bfloat16)

    # fc1 split: h = bn(state) @ W1[:S] + action @ W1[S:] + b1   (no lane concat).
    h = jnp.dot(s_bn, w1s_ref[...], preferred_element_type=jnp.float32)
    h = h + jnp.dot(a, w1a_ref[...], preferred_element_type=jnp.float32)
    h = jnp.maximum(h + b1_ref[...], 0.0).astype(jnp.bfloat16)

    h = jnp.maximum(
        jnp.dot(h, w2_ref[...], preferred_element_type=jnp.float32) + b2_ref[...], 0.0
    ).astype(jnp.bfloat16)
    h = jnp.maximum(
        jnp.dot(h, w3_ref[...], preferred_element_type=jnp.float32) + b3_ref[...], 0.0
    ).astype(jnp.bfloat16)
    # fc4 is zero-padded to 128 output lanes (lane-dense h4, bit-identical result).
    h4 = jnp.maximum(
        jnp.dot(h, w4_ref[...], preferred_element_type=jnp.float32) + b4_ref[...], 0.0
    )                                                            # stays f32

    # fc5 (single output column): VPU mul + lane reduce in f32.
    q = jnp.sum(h4 * w5_ref[...], axis=-1, keepdims=True) + b5_ref[...]
    out_ref[...] = q.astype(out_ref.dtype)


# ---------------------------------------------------------------------------
# One-time weight packing (call once, reuse across every forward).
# ---------------------------------------------------------------------------
def prepare_critic_params(params):
    """Split fc1, zero-pad fc4/fc5 to 128 lanes, cast matmul weights to bf16."""
    S = params["bn_gamma"].shape[1]
    h4 = params["w4"].shape[1]                            # 64
    h4_pad = _round_up(h4, 128)                           # 128
    pad4 = h4_pad - h4

    bf = lambda w: w.astype(jnp.bfloat16)
    w4_p = jnp.pad(params["w4"], ((0, 0), (0, pad4)))
    b4_p = jnp.pad(params["b4"], ((0, 0), (0, pad4)))
    w5_row = jnp.pad(params["w5"], ((0, pad4), (0, 0))).T  # (1, h4_pad), f32

    return {
        "gamma": params["bn_gamma"], "beta": params["bn_beta"],
        "w1s": bf(params["w1"][:S]), "w1a": bf(params["w1"][S:]), "b1": params["b1"],
        "w2": bf(params["w2"]), "b2": params["b2"],
        "w3": bf(params["w3"]), "b3": params["b3"],
        "w4": bf(w4_p), "b4": b4_p,
        "w5": w5_row, "b5": params["b5"],
    }


def critic_forward(state, action, packed, *, tile_b=256, stats_tile_b=4096):
    """Critic forward: BN-stats pre-pass kernel + batch-tiled fused MLP kernel.

    tile_b:       MLP batch tile (sweep {128,256,512,1024}; 256 default for
                  v6e/v7x, prefer 512-1024 on v5e).
    stats_tile_b: streaming tile for the stats pre-pass (overhead-amortized).
    """
    B, S = state.shape
    A = action.shape[1]

    # ---- Pass 1: global-batch BN sums with its own large streaming tile.
    stats_tile = min(stats_tile_b, _round_up(max(B, 1), 16))
    b_pad_s = _round_up(B, stats_tile)
    state_s = jnp.pad(state, ((0, b_pad_s - B), (0, 0))) if b_pad_s != B else state
    row_spec = pl.BlockSpec((1, S), lambda i: (0, 0))
    s_sum, s_sumsq = pl.pallas_call(
        _bn_stats_kernel,
        out_shape=(jax.ShapeDtypeStruct((1, S), jnp.float32),
                   jax.ShapeDtypeStruct((1, S), jnp.float32)),
        grid=(b_pad_s // stats_tile,),
        in_specs=[pl.BlockSpec((stats_tile, S), lambda i: (i, 0))],
        out_specs=(row_spec, row_spec),
        compiler_params=pltpu.CompilerParams(dimension_semantics=("arbitrary",)),
    )(state_s)

    # ---- Pass 2: batch-tiled MLP. Cap the tile at ceil(B/2) (rounded to 16) so
    # there are >= 2 tiles whenever possible -> both v7x TensorCores get work.
    tile = min(tile_b, _round_up(pl.cdiv(max(B, 1), 2), 16))
    b_pad = _round_up(B, tile)
    if b_pad != B:
        state_p = jnp.pad(state, ((0, b_pad - B), (0, 0)))
        action_p = jnp.pad(action, ((0, b_pad - B), (0, 0)))
    else:
        state_p, action_p = state, action
    n_tiles = b_pad // tile

    p = packed
    const = lambda arr: pl.BlockSpec(arr.shape, lambda i: (0, 0))  # VMEM-resident
    in_specs = [
        pl.BlockSpec((tile, S), lambda i: (i, 0)),   # state   (streamed)
        pl.BlockSpec((tile, A), lambda i: (i, 0)),   # action  (streamed)
        const(s_sum), const(s_sumsq), const(p["gamma"]), const(p["beta"]),
        const(p["w1s"]), const(p["w1a"]), const(p["b1"]),
        const(p["w2"]), const(p["b2"]),
        const(p["w3"]), const(p["b3"]),
        const(p["w4"]), const(p["b4"]),
        const(p["w5"]), const(p["b5"]),
    ]

    out = pl.pallas_call(
        functools.partial(_critic_mlp_kernel, inv_b=1.0 / float(B)),
        out_shape=jax.ShapeDtypeStruct((b_pad, 1), jnp.float32),
        grid=(n_tiles,),
        in_specs=in_specs,
        out_specs=pl.BlockSpec((tile, 1), lambda i: (i, 0)),
        compiler_params=pltpu.CompilerParams(
            dimension_semantics=("parallel",),       # shard batch tiles across 2 TCs (v7x)
            vmem_limit_bytes=32 * 1024 * 1024,       # safe ceiling on v7x (64 MiB physical)
        ),
    )(state_p, action_p, s_sum, s_sumsq, p["gamma"], p["beta"],
      p["w1s"], p["w1a"], p["b1"], p["w2"], p["b2"], p["w3"], p["b3"],
      p["w4"], p["b4"], p["w5"], p["b5"])

    return out[:B] if b_pad != B else out


def init_critic_params(key, state_dim, action_dim,
                       fc_units=256, fc_units1=128, fc_units2=128, fc_units3=64):
    """Deterministic parameter init mirroring the PyTorch module's shapes.

    Weights are stored transposed as [in, out] for x @ W. hidden_init uses
    weight.size()[0] == out_features as "fan_in" (as written in the spec).
    """
    in_dim = state_dim + action_dim

    def uni(k, shape, lim):
        return jax.random.uniform(k, shape, jnp.float32, -lim, lim)

    ks = jax.random.split(key, 10)
    return {
        "bn_gamma": jnp.ones((1, state_dim), jnp.float32),
        "bn_beta": jnp.zeros((1, state_dim), jnp.float32),
        "w1": uni(ks[0], (in_dim, fc_units),      1.0 / jnp.sqrt(fc_units)),
        "b1": uni(ks[1], (1, fc_units),           1.0 / jnp.sqrt(in_dim)),
        "w2": uni(ks[2], (fc_units, fc_units1),   1.0 / jnp.sqrt(fc_units1)),
        "b2": uni(ks[3], (1, fc_units1),          1.0 / jnp.sqrt(fc_units)),
        "w3": uni(ks[4], (fc_units1, fc_units2),  1.0 / jnp.sqrt(fc_units2)),
        "b3": uni(ks[5], (1, fc_units2),          1.0 / jnp.sqrt(fc_units1)),
        "w4": uni(ks[6], (fc_units2, fc_units3),  1.0 / jnp.sqrt(fc_units3)),
        "b4": uni(ks[7], (1, fc_units3),          1.0 / jnp.sqrt(fc_units2)),
        "w5": uni(ks[8], (fc_units3, 1),          0.003),
        "b5": uni(ks[9], (1, 1),                  1.0 / jnp.sqrt(fc_units3)),
    }


def critic_reference(state, action, params):
    """Pure-JAX f32 reference of the PyTorch forward pass."""
    mean = jnp.mean(state, axis=0, keepdims=True)
    var = jnp.mean((state - mean) ** 2, axis=0, keepdims=True)
    s_bn = (state - mean) / jnp.sqrt(var + _BN_EPS) * params["bn_gamma"] + params["bn_beta"]
    x = jnp.concatenate([s_bn, action], axis=1)
    x = jnp.maximum(x @ params["w1"] + params["b1"], 0.0)
    x = jnp.maximum(x @ params["w2"] + params["b2"], 0.0)
    x = jnp.maximum(x @ params["w3"] + params["b3"], 0.0)
    x = jnp.maximum(x @ params["w4"] + params["b4"], 0.0)
    return x @ params["w5"] + params["b5"]


def critic_reference_bf16(state, action, params):
    """Reference matching the kernel numerics (bf16 MXU fc1..fc4, f32 fc5)."""
    S = state.shape[1]
    mean = jnp.mean(state, axis=0, keepdims=True)
    var = jnp.maximum(jnp.mean(state * state, axis=0, keepdims=True) - mean * mean, 0.0)
    scale = params["bn_gamma"] * lax.rsqrt(var + _BN_EPS)
    shift = params["bn_beta"] - mean * scale

    def mm(x, w):
        return jnp.dot(x.astype(jnp.bfloat16), w.astype(jnp.bfloat16),
                       preferred_element_type=jnp.float32)

    s_bn = state * scale + shift
    h = jnp.maximum(mm(s_bn, params["w1"][:S]) + mm(action, params["w1"][S:])
                    + params["b1"], 0.0)
    h = jnp.maximum(mm(h, params["w2"]) + params["b2"], 0.0)
    h = jnp.maximum(mm(h, params["w3"]) + params["b3"], 0.0)
    h = jnp.maximum(mm(h, params["w4"]) + params["b4"], 0.0)
    return h @ params["w5"] + params["b5"]          # fc5 in f32 (VPU path in kernel)


if __name__ == "__main__":
    # Small, self-consistent shapes: state_size=8, action_size=4, num_agent=2.
    state_size, action_size, num_agent = 8, 4, 2
    B = 8
    state_dim = state_size * num_agent      # 16
    action_dim = action_size * num_agent    # 8

    key = jax.random.PRNGKey(0)
    k_s, k_a, k_p = jax.random.split(key, 3)
    state = jax.random.normal(k_s, (B, state_dim), jnp.float32)
    action = jax.random.normal(k_a, (B, action_dim), jnp.float32)
    params = init_critic_params(k_p, state_dim, action_dim)

    packed = prepare_critic_params(params)            # one-time weight packing
    fwd = jax.jit(functools.partial(critic_forward, tile_b=256))

    q = fwd(state, action, packed)
    q = jax.block_until_ready(q)
    assert q.shape == (B, 1)

    # Primary correctness check: reference with identical bf16/f32-accum numerics.
    q_bf16 = critic_reference_bf16(state, action, params)
    assert jnp.allclose(q, q_bf16, atol=2e-3, rtol=2e-3), (q, q_bf16)

    # Sanity check vs. pure-f32 math (bf16 MXU inputs change numerics slightly).
    q_f32 = critic_reference(state, action, params)
    assert jnp.allclose(q, q_f32, atol=3e-2, rtol=3e-2), (q, q_f32)

    print("KERNEL_OK")
</pallas_src>

<mosaic_0001>
module attributes {stable_mosaic.version = 11 : i64} {
  func.func @_bn_stats_kernel(%arg0: i32, %arg1: memref<16x16xf32, #tpu.memory_space<vmem>>, %arg2: memref<1x16xf32, #tpu.memory_space<vmem>>, %arg3: memref<1x16xf32, #tpu.memory_space<vmem>>) attributes {dimension_semantics = [#tpu.dimension_semantics<arbitrary>], iteration_bounds = array<i64: 1>, scalar_prefetch = 0 : i64, scratch_operands = 0 : i64, tpu.core_type = #tpu.core_type<tc>, window_params = [{transform_indices = @transform_0, window_bounds = array<i64: 16, 16>}, {pipeline_mode = #tpu.pipeline_mode<synchronous>, transform_indices = @transform_1, window_bounds = array<i64: 1, 16>}, {pipeline_mode = #tpu.pipeline_mode<synchronous>, transform_indices = @transform_2, window_bounds = array<i64: 1, 16>}]} {
    %c0_i32 = arith.constant 0 : i32
    %0 = arith.cmpi eq, %arg0, %c0_i32 : i32
    %1 = arith.extui %0 : i1 to i32
    %c0_i32_0 = arith.constant 0 : i32
    %2 = arith.cmpi ne, %1, %c0_i32_0 : i32
    scf.if %2 {
      %cst_11 = arith.constant 0.000000e+00 : f32
      %15 = vector.broadcast %cst_11 : f32 to vector<1x16xf32>
      %c0_12 = arith.constant 0 : index
      %c0_13 = arith.constant 0 : index
      %16 = vector.load %arg2[%c0_12, %c0_13] : memref<1x16xf32, #tpu.memory_space<vmem>>, vector<1x16xf32>
      tpu.vector_store %arg2[%c0_12, %c0_13], %15 {strides = array<i32>} : memref<1x16xf32, #tpu.memory_space<vmem>>, vector<1x16xf32>,
      %cst_14 = arith.constant 0.000000e+00 : f32
      %17 = vector.broadcast %cst_14 : f32 to vector<1x16xf32>
      %c0_15 = arith.constant 0 : index
      %c0_16 = arith.constant 0 : index
      %18 = vector.load %arg3[%c0_15, %c0_16] : memref<1x16xf32, #tpu.memory_space<vmem>>, vector<1x16xf32>
      tpu.vector_store %arg3[%c0_15, %c0_16], %17 {strides = array<i32>} : memref<1x16xf32, #tpu.memory_space<vmem>>, vector<1x16xf32>,
    } else {
    }
    %c0 = arith.constant 0 : index
    %c0_1 = arith.constant 0 : index
    %3 = vector.load %arg1[%c0, %c0_1] : memref<16x16xf32, #tpu.memory_space<vmem>>, vector<16x16xf32>
    %c0_2 = arith.constant 0 : index
    %c0_3 = arith.constant 0 : index
    %4 = vector.load %arg2[%c0_2, %c0_3] : memref<1x16xf32, #tpu.memory_space<vmem>>, vector<1x16xf32>
    %cst = arith.constant dense<0.000000e+00> : vector<16xf32>
    %5 = vector.multi_reduction <add>, %3, %cst [0] : vector<16x16xf32> to vector<16xf32>
    %6 = vector.shape_cast %5 : vector<16xf32> to vector<1x16xf32>
    %7 = arith.addf %4, %6 : vector<1x16xf32>
    %c0_4 = arith.constant 0 : index
    %c0_5 = arith.constant 0 : index
    %8 = vector.load %arg2[%c0_4, %c0_5] : memref<1x16xf32, #tpu.memory_space<vmem>>, vector<1x16xf32>
    tpu.vector_store %arg2[%c0_4, %c0_5], %7 {strides = array<i32>} : memref<1x16xf32, #tpu.memory_space<vmem>>, vector<1x16xf32>,
    %c0_6 = arith.constant 0 : index
    %c0_7 = arith.constant 0 : index
    %9 = vector.load %arg3[%c0_6, %c0_7] : memref<1x16xf32, #tpu.memory_space<vmem>>, vector<1x16xf32>
    %10 = arith.mulf %3, %3 : vector<16x16xf32>
    %cst_8 = arith.constant dense<0.000000e+00> : vector<16xf32>
    %11 = vector.multi_reduction <add>, %10, %cst_8 [0] : vector<16x16xf32> to vector<16xf32>
    %12 = vector.shape_cast %11 : vector<16xf32> to vector<1x16xf32>
    %13 = arith.addf %9, %12 : vector<1x16xf32>
    %c0_9 = arith.constant 0 : index
    %c0_10 = arith.constant 0 : index
    %14 = vector.load %arg3[%c0_9, %c0_10] : memref<1x16xf32, #tpu.memory_space<vmem>>, vector<1x16xf32>
    tpu.vector_store %arg3[%c0_9, %c0_10], %13 {strides = array<i32>} : memref<1x16xf32, #tpu.memory_space<vmem>>, vector<1x16xf32>,
    return
  }
  func.func @transform_0(%arg0: i32) -> (i32, i32) {
    %c0_i32 = arith.constant 0 : i32
    %c0_i32_0 = arith.constant 0 : i32
    return %arg0, %c0_i32 : i32, i32
  }
  func.func @transform_1(%arg0: i32) -> (i32, i32) {
    %c0_i32 = arith.constant 0 : i32
    %c0_i32_0 = arith.constant 0 : i32
    %c0_i32_1 = arith.constant 0 : i32
    return %c0_i32, %c0_i32_0 : i32, i32
  }
  func.func @transform_2(%arg0: i32) -> (i32, i32) {
    %c0_i32 = arith.constant 0 : i32
    %c0_i32_0 = arith.constant 0 : i32
    %c0_i32_1 = arith.constant 0 : i32
    return %c0_i32, %c0_i32_0 : i32, i32
  }
}

module attributes {stable_mosaic.version = 11 : i64} {
  func.func @_critic_mlp_kernel(%arg0: i32, %arg1: memref<16x16xf32, #tpu.memory_space<vmem>>, %arg2: memref<16x8xf32, #tpu.memory_space<vmem>>, %arg3: memref<1x16xf32, #tpu.memory_space<vmem>>, %arg4: memref<1x16xf32, #tpu.memory_space<vmem>>, %arg5: memref<1x16xf32, #tpu.memory_space<vmem>>, %arg6: memref<1x16xf32, #tpu.memory_space<vmem>>, %arg7: memref<16x256xbf16, #tpu.memory_space<vmem>>, %arg8: memref<8x256xbf16, #tpu.memory_space<vmem>>, %arg9: memref<1x256xf32, #tpu.memory_space<vmem>>, %arg10: memref<256x128xbf16, #tpu.memory_space<vmem>>, %arg11: memref<1x128xf32, #tpu.memory_space<vmem>>, %arg12: memref<128x128xbf16, #tpu.memory_space<vmem>>, %arg13: memref<1x128xf32, #tpu.memory_space<vmem>>, %arg14: memref<128x128xbf16, #tpu.memory_space<vmem>>, %arg15: memref<1x128xf32, #tpu.memory_space<vmem>>, %arg16: memref<1x128xf32, #tpu.memory_space<vmem>>, %arg17: memref<1x1xf32, #tpu.memory_space<vmem>>, %arg18: memref<16x1xf32, #tpu.memory_space<vmem>>) attributes {dimension_semantics = [#tpu.dimension_semantics<parallel>], iteration_bounds = array<i64: 1>, scalar_prefetch = 0 : i64, scratch_operands = 0 : i64, tpu.core_type = #tpu.core_type<tc>, window_params = [{transform_indices = @transform_0, window_bounds = array<i64: 16, 16>}, {transform_indices = @transform_1, window_bounds = array<i64: 16, 8>}, {pipeline_mode = #tpu.pipeline_mode<synchronous>, transform_indices = @transform_2, window_bounds = array<i64: 1, 16>}, {pipeline_mode = #tpu.pipeline_mode<synchronous>, transform_indices = @transform_3, window_bounds = array<i64: 1, 16>}, {pipeline_mode = #tpu.pipeline_mode<synchronous>, transform_indices = @transform_4, window_bounds = array<i64: 1, 16>}, {pipeline_mode = #tpu.pipeline_mode<synchronous>, transform_indices = @transform_5, window_bounds = array<i64: 1, 16>}, {pipeline_mode = #tpu.pipeline_mode<synchronous>, transform_indices = @transform_6, window_bounds = array<i64: 16, 256>}, {pipeline_mode = #tpu.pipeline_mode<synchronous>, transform_indices = @transform_7, window_bounds = array<i64: 8, 256>}, {pipeline_mode = #tpu.pipeline_mode<synchronous>, transform_indices = @transform_8, window_bounds = array<i64: 1, 256>}, {pipeline_mode = #tpu.pipeline_mode<synchronous>, transform_indices = @transform_9, window_bounds = array<i64: 256, 128>}, {pipeline_mode = #tpu.pipeline_mode<synchronous>, transform_indices = @transform_10, window_bounds = array<i64: 1, 128>}, {pipeline_mode = #tpu.pipeline_mode<synchronous>, transform_indices = @transform_11, window_bounds = array<i64: 128, 128>}, {pipeline_mode = #tpu.pipeline_mode<synchronous>, transform_indices = @transform_12, window_bounds = array<i64: 1, 128>}, {pipeline_mode = #tpu.pipeline_mode<synchronous>, transform_indices = @transform_13, window_bounds = array<i64: 128, 128>}, {pipeline_mode = #tpu.pipeline_mode<synchronous>, transform_indices = @transform_14, window_bounds = array<i64: 1, 128>}, {pipeline_mode = #tpu.pipeline_mode<synchronous>, transform_indices = @transform_15, window_bounds = array<i64: 1, 128>}, {pipeline_mode = #tpu.pipeline_mode<synchronous>, transform_indices = @transform_16, window_bounds = array<i64: 1, 1>}, {transform_indices = @transform_17, window_bounds = array<i64: 16, 1>}]} {
    %c0 = arith.constant 0 : index
    %c0_0 = arith.constant 0 : index
    %0 = vector.load %arg3[%c0, %c0_0] : memref<1x16xf32, #tpu.memory_space<vmem>>, vector<1x16xf32>
    %cst = arith.constant 1.250000e-01 : f32
    %1 = vector.broadcast %cst : f32 to vector<1x16xf32>
    %2 = arith.mulf %0, %1 : vector<1x16xf32>
    %c0_1 = arith.constant 0 : index
    %c0_2 = arith.constant 0 : index
    %3 = vector.load %arg4[%c0_1, %c0_2] : memref<1x16xf32, #tpu.memory_space<vmem>>, vector<1x16xf32>
    %cst_3 = arith.constant 1.250000e-01 : f32
    %4 = vector.broadcast %cst_3 : f32 to vector<1x16xf32>
    %5 = arith.mulf %3, %4 : vector<1x16xf32>
    %6 = arith.mulf %2, %2 : vector<1x16xf32>
    %7 = arith.subf %5, %6 : vector<1x16xf32>
    %cst_4 = arith.constant 0.000000e+00 : f32
    %8 = vector.broadcast %cst_4 : f32 to vector<1x16xf32>
    %9 = arith.maximumf %7, %8 : vector<1x16xf32>
    %c0_5 = arith.constant 0 : index
    %c0_6 = arith.constant 0 : index
    %10 = vector.load %arg5[%c0_5, %c0_6] : memref<1x16xf32, #tpu.memory_space<vmem>>, vector<1x16xf32>
    %cst_7 = arith.constant 9.99999974E-6 : f32
    %11 = vector.broadcast %cst_7 : f32 to vector<1x16xf32>
    %12 = arith.addf %9, %11 : vector<1x16xf32>
    %13 = math.rsqrt %12 : vector<1x16xf32>
    %14 = arith.mulf %10, %13 : vector<1x16xf32>
    %c0_8 = arith.constant 0 : index
    %c0_9 = arith.constant 0 : index
    %15 = vector.load %arg6[%c0_8, %c0_9] : memref<1x16xf32, #tpu.memory_space<vmem>>, vector<1x16xf32>
    %16 = arith.mulf %2, %14 : vector<1x16xf32>
    %17 = arith.subf %15, %16 : vector<1x16xf32>
    %c0_10 = arith.constant 0 : index
    %c0_11 = arith.constant 0 : index
    %18 = vector.load %arg1[%c0_10, %c0_11] : memref<16x16xf32, #tpu.memory_space<vmem>>, vector<16x16xf32>
    %19 = vector.broadcast %14 : vector<1x16xf32> to vector<16x16xf32>
    %20 = arith.mulf %18, %19 : vector<16x16xf32>
    %21 = vector.broadcast %17 : vector<1x16xf32> to vector<16x16xf32>
    %22 = arith.addf %20, %21 : vector<16x16xf32>
    %23 = arith.truncf %22 : vector<16x16xf32> to vector<16x16xbf16>
    %c0_12 = arith.constant 0 : index
    %c0_13 = arith.constant 0 : index
    %24 = vector.load %arg2[%c0_12, %c0_13] : memref<16x8xf32, #tpu.memory_space<vmem>>, vector<16x8xf32>
    %25 = arith.truncf %24 : vector<16x8xf32> to vector<16x8xbf16>
    %c0_14 = arith.constant 0 : index
    %c0_15 = arith.constant 0 : index
    %26 = vector.load %arg7[%c0_14, %c0_15] : memref<16x256xbf16, #tpu.memory_space<vmem>>, vector<16x256xbf16>
    %cst_16 = arith.constant dense<0.000000e+00> : vector<16x256xf32>
    %27 = tpu.matmul %23, %26, %cst_16 {dimension_numbers = #tpu.dot_dimension_numbers<[1], [0], [0], [1], [0, 0, 1, 1], [], []>} : vector<16x16xbf16>, vector<16x256xbf16>, vector<16x256xf32> -> vector<16x256xf32>
    %c0_17 = arith.constant 0 : index
    %c0_18 = arith.constant 0 : index
    %28 = vector.load %arg8[%c0_17, %c0_18] : memref<8x256xbf16, #tpu.memory_space<vmem>>, vector<8x256xbf16>
    %cst_19 = arith.constant dense<0.000000e+00> : vector<16x256xf32>
    %29 = tpu.matmul %25, %28, %cst_19 {dimension_numbers = #tpu.dot_dimension_numbers<[1], [0], [0], [1], [0, 0, 1, 1], [], []>} : vector<16x8xbf16>, vector<8x256xbf16>, vector<16x256xf32> -> vector<16x256xf32>
    %30 = arith.addf %27, %29 : vector<16x256xf32>
    %c0_20 = arith.constant 0 : index
    %c0_21 = arith.constant 0 : index
    %31 = vector.load %arg9[%c0_20, %c0_21] : memref<1x256xf32, #tpu.memory_space<vmem>>, vector<1x256xf32>
    %32 = vector.broadcast %31 : vector<1x256xf32> to vector<16x256xf32>
    %33 = arith.addf %30, %32 : vector<16x256xf32>
    %cst_22 = arith.constant 0.000000e+00 : f32
    %34 = vector.broadcast %cst_22 : f32 to vector<16x256xf32>
    %35 = arith.maximumf %33, %34 : vector<16x256xf32>
    %36 = arith.truncf %35 : vector<16x256xf32> to vector<16x256xbf16>
    %c0_23 = arith.constant 0 : index
    %c0_24 = arith.constant 0 : index
    %37 = vector.load %arg10[%c0_23, %c0_24] : memref<256x128xbf16, #tpu.memory_space<vmem>>, vector<256x128xbf16>
    %cst_25 = arith.constant dense<0.000000e+00> : vector<16x128xf32>
    %38 = tpu.matmul %36, %37, %cst_25 {dimension_numbers = #tpu.dot_dimension_numbers<[1], [0], [0], [1], [0, 0, 1, 1], [], []>} : vector<16x256xbf16>, vector<256x128xbf16>, vector<16x128xf32> -> vector<16x128xf32>
    %c0_26 = arith.constant 0 : index
    %c0_27 = arith.constant 0 : index
    %39 = vector.load %arg11[%c0_26, %c0_27] : memref<1x128xf32, #tpu.memory_space<vmem>>, vector<1x128xf32>
    %40 = vector.broadcast %39 : vector<1x128xf32> to vector<16x128xf32>
    %41 = arith.addf %38, %40 : vector<16x128xf32>
    %cst_28 = arith.constant 0.000000e+00 : f32
    %42 = vector.broadcast %cst_28 : f32 to vector<16x128xf32>
    %43 = arith.maximumf %41, %42 : vector<16x128xf32>
    %44 = arith.truncf %43 : vector<16x128xf32> to vector<16x128xbf16>
    %c0_29 = arith.constant 0 : index
    %c0_30 = arith.constant 0 : index
    %45 = vector.load %arg12[%c0_29, %c0_30] : memref<128x128xbf16, #tpu.memory_space<vmem>>, vector<128x128xbf16>
    %cst_31 = arith.constant dense<0.000000e+00> : vector<16x128xf32>
    %46 = tpu.matmul %44, %45, %cst_31 {dimension_numbers = #tpu.dot_dimension_numbers<[1], [0], [0], [1], [0, 0, 1, 1], [], []>} : vector<16x128xbf16>, vector<128x128xbf16>, vector<16x128xf32> -> vector<16x128xf32>
    %c0_32 = arith.constant 0 : index
    %c0_33 = arith.constant 0 : index
    %47 = vector.load %arg13[%c0_32, %c0_33] : memref<1x128xf32, #tpu.memory_space<vmem>>, vector<1x128xf32>
    %48 = vector.broadcast %47 : vector<1x128xf32> to vector<16x128xf32>
    %49 = arith.addf %46, %48 : vector<16x128xf32>
    %cst_34 = arith.constant 0.000000e+00 : f32
    %50 = vector.broadcast %cst_34 : f32 to vector<16x128xf32>
    %51 = arith.maximumf %49, %50 : vector<16x128xf32>
    %52 = arith.truncf %51 : vector<16x128xf32> to vector<16x128xbf16>
    %c0_35 = arith.constant 0 : index
    %c0_36 = arith.constant 0 : index
    %53 = vector.load %arg14[%c0_35, %c0_36] : memref<128x128xbf16, #tpu.memory_space<vmem>>, vector<128x128xbf16>
    %cst_37 = arith.constant dense<0.000000e+00> : vector<16x128xf32>
    %54 = tpu.matmul %52, %53, %cst_37 {dimension_numbers = #tpu.dot_dimension_numbers<[1], [0], [0], [1], [0, 0, 1, 1], [], []>} : vector<16x128xbf16>, vector<128x128xbf16>, vector<16x128xf32> -> vector<16x128xf32>
    %c0_38 = arith.constant 0 : index
    %c0_39 = arith.constant 0 : index
    %55 = vector.load %arg15[%c0_38, %c0_39] : memref<1x128xf32, #tpu.memory_space<vmem>>, vector<1x128xf32>
    %56 = vector.broadcast %55 : vector<1x128xf32> to vector<16x128xf32>
    %57 = arith.addf %54, %56 : vector<16x128xf32>
    %cst_40 = arith.constant 0.000000e+00 : f32
    %58 = vector.broadcast %cst_40 : f32 to vector<16x128xf32>
    %59 = arith.maximumf %57, %58 : vector<16x128xf32>
    %c0_41 = arith.constant 0 : index
    %c0_42 = arith.constant 0 : index
    %60 = vector.load %arg16[%c0_41, %c0_42] : memref<1x128xf32, #tpu.memory_space<vmem>>, vector<1x128xf32>
    %61 = vector.broadcast %60 : vector<1x128xf32> to vector<16x128xf32>
    %62 = arith.mulf %59, %61 : vector<16x128xf32>
    %cst_43 = arith.constant dense<0.000000e+00> : vector<16xf32>
    %63 = vector.multi_reduction <add>, %62, %cst_43 [1] : vector<16x128xf32> to vector<16xf32>
    %64 = vector.shape_cast %63 : vector<16xf32> to vector<16x1xf32>
    %c0_44 = arith.constant 0 : index
    %c0_45 = arith.constant 0 : index
    %65 = vector.load %arg17[%c0_44, %c0_45] : memref<1x1xf32, #tpu.memory_space<vmem>>, vector<1x1xf32>
    %66 = vector.broadcast %65 : vector<1x1xf32> to vector<16x1xf32>
    %67 = arith.addf %64, %66 : vector<16x1xf32>
    %c0_46 = arith.constant 0 : index
    %c0_47 = arith.constant 0 : index
    %68 = vector.load %arg18[%c0_46, %c0_47] : memref<16x1xf32, #tpu.memory_space<vmem>>, vector<16x1xf32>
    tpu.vector_store %arg18[%c0_46, %c0_47], %67 {strides = array<i32>} : memref<16x1xf32, #tpu.memory_space<vmem>>, vector<16x1xf32>,
    return
  }
  func.func @transform_0(%arg0: i32) -> (i32, i32) {
    %c0_i32 = arith.constant 0 : i32
    %c0_i32_0 = arith.constant 0 : i32
    return %arg0, %c0_i32 : i32, i32
  }
  func.func @transform_1(%arg0: i32) -> (i32, i32) {
    %c0_i32 = arith.constant 0 : i32
    %c0_i32_0 = arith.constant 0 : i32
    return %arg0, %c0_i32 : i32, i32
  }
  func.func @transform_2(%arg0: i32) -> (i32, i32) {
    %c0_i32 = arith.constant 0 : i32
    %c0_i32_0 = arith.constant 0 : i32
    %c0_i32_1 = arith.constant 0 : i32
    return %c0_i32, %c0_i32_0 : i32, i32
  }
  func.func @transform_3(%arg0: i32) -> (i32, i32) {
    %c0_i32 = arith.constant 0 : i32
    %c0_i32_0 = arith.constant 0 : i32
    %c0_i32_1 = arith.constant 0 : i32
    return %c0_i32, %c0_i32_0 : i32, i32
  }
  func.func @transform_4(%arg0: i32) -> (i32, i32) {
    %c0_i32 = arith.constant 0 : i32
    %c0_i32_0 = arith.constant 0 : i32
    %c0_i32_1 = arith.constant 0 : i32
    return %c0_i32, %c0_i32_0 : i32, i32
  }
  func.func @transform_5(%arg0: i32) -> (i32, i32) {
    %c0_i32 = arith.constant 0 : i32
    %c0_i32_0 = arith.constant 0 : i32
    %c0_i32_1 = arith.constant 0 : i32
    return %c0_i32, %c0_i32_0 : i32, i32
  }
  func.func @transform_6(%arg0: i32) -> (i32, i32) {
    %c0_i32 = arith.constant 0 : i32
    %c0_i32_0 = arith.constant 0 : i32
    %c0_i32_1 = arith.constant 0 : i32
    return %c0_i32, %c0_i32_0 : i32, i32
  }
  func.func @transform_7(%arg0: i32) -> (i32, i32) {
    %c0_i32 = arith.constant 0 : i32
    %c0_i32_0 = arith.constant 0 : i32
    %c0_i32_1 = arith.constant 0 : i32
    return %c0_i32, %c0_i32_0 : i32, i32
  }
  func.func @transform_8(%arg0: i32) -> (i32, i32) {
    %c0_i32 = arith.constant 0 : i32
    %c0_i32_0 = arith.constant 0 : i32
    %c0_i32_1 = arith.constant 0 : i32
    return %c0_i32, %c0_i32_0 : i32, i32
  }
  func.func @transform_9(%arg0: i32) -> (i32, i32) {
    %c0_i32 = arith.constant 0 : i32
    %c0_i32_0 = arith.constant 0 : i32
    %c0_i32_1 = arith.constant 0 : i32
    return %c0_i32, %c0_i32_0 : i32, i32
  }
  func.func @transform_10(%arg0: i32) -> (i32, i32) {
    %c0_i32 = arith.constant 0 : i32
    %c0_i32_0 = arith.constant 0 : i32
    %c0_i32_1 = arith.constant 0 : i32
    return %c0_i32, %c0_i32_0 : i32, i32
  }
  func.func @transform_11(%arg0: i32) -> (i32, i32) {
    %c0_i32 = arith.constant 0 : i32
    %c0_i32_0 = arith.constant 0 : i32
    %c0_i32_1 = arith.constant 0 : i32
    return %c0_i32, %c0_i32_0 : i32, i32
  }
  func.func @transform_12(%arg0: i32) -> (i32, i32) {
    %c0_i32 = arith.constant 0 : i32
    %c0_i32_0 = arith.constant 0 : i32
    %c0_i32_1 = arith.constant 0 : i32
    return %c0_i32, %c0_i32_0 : i32, i32
  }
  func.func @transform_13(%arg0: i32) -> (i32, i32) {
    %c0_i32 = arith.constant 0 : i32
    %c0_i32_0 = arith.constant 0 : i32
    %c0_i32_1 = arith.constant 0 : i32
    return %c0_i32, %c0_i32_0 : i32, i32
  }
  func.func @transform_14(%arg0: i32) -> (i32, i32) {
    %c0_i32 = arith.constant 0 : i32
    %c0_i32_0 = arith.constant 0 : i32
    %c0_i32_1 = arith.constant 0 : i32
    return %c0_i32, %c0_i32_0 : i32, i32
  }
  func.func @transform_15(%arg0: i32) -> (i32, i32) {
    %c0_i32 = arith.constant 0 : i32
    %c0_i32_0 = arith.constant 0 : i32
    %c0_i32_1 = arith.constant 0 : i32
    return %c0_i32, %c0_i32_0 : i32, i32
  }
  func.func @transform_16(%arg0: i32) -> (i32, i32) {
    %c0_i32 = arith.constant 0 : i32
    %c0_i32_0 = arith.constant 0 : i32
    %c0_i32_1 = arith.constant 0 : i32
    return %c0_i32, %c0_i32_0 : i32, i32
  }
  func.func @transform_17(%arg0: i32) -> (i32, i32) {
    %c0_i32 = arith.constant 0 : i32
    %c0_i32_0 = arith.constant 0 : i32
    return %arg0, %c0_i32 : i32, i32
  }
}

</mosaic_0001>

<llo_original>
// kernel: critic_forward.2
$region0: #{critic_forward.2}
  #allocation0 [shape = 'u32[]', space=smem, size = 0x4, offset = 0x4, fixed_abs, tag = 'smem constant byte address 0x4 - core index']
  #allocation1 [shape = 'u32[144,128]{1,0:T(1,128)}', space=vmem, size = 0x12000, scoped, tag = 'internal scratch']
  %s0 = inlined_call_operand.vmem [shape: f32[16,16], index: 0, kind: input, shape index: {}]
  %s1 = inlined_call_operand.vmem [shape: f32[1,16], index: 1, kind: output, shape index: {0}]
  %s2 = inlined_call_operand.vmem [shape: f32[1,16], index: 2, kind: output, shape index: {1}]
  %3 = xla_tuple %s1, %s2
  %s4 = sld [smem:[#allocation0]]
  $region26: #{critic_forward.2} parent=0
    _
  %s6 = ssub.s32 1, %s4
  %s7 = scalar_select 0, %s6, %s4
  // Predicated region
  $region2: #{critic_forward.2} parent=0 // pred_check
    _
  $region3: #{critic_forward.2} parent=0 // pred_check_branch
    %9 = sbr.rel (0) target = $region5
  $region4: #{critic_forward.2} parent=0 // pred_region
    _
  $region5: #{critic_forward.2} parent=0 // pred_fallthru
    _
  %p10 = scmp.eq.s32.totalorder 0, 0
  // Predicated region
  $region6: #{critic_forward.2} parent=0 // pred_check
    %p11 = pneg %p10
  $region7: #{critic_forward.2} parent=0 // pred_check_branch
    %13 = sbr.rel (%p11) target = $region9
  $region8: #{critic_forward.2} parent=0 // pred_region
    %vm14 = vcmask 122880
    %15 = vst.msk [vmem:[%s1] sm:$0x1] %vm14, 0.0
    %16 = vst.msk [vmem:[%s2] sm:$0x1] %vm14, 0.0
  $region9: #{critic_forward.2} parent=0 // pred_fallthru
    _
  %v17 = vld [vmem:[%s0] sm:$0xff]
  %v18 = vld [vmem:[%s0 + $0x8] sm:$0xff]
  %v19 = vld [vmem:[%s1] sm:$0x1]
  %vm20 = vcmask 130048
  %v21 = vsel %vm20, %v17, 0.0
  %v22 = vsel %vm20, %v18, 0.0
  %v23 = vadd.f32 %v21, %v22
  %v24 = vrot.slane %v23, 4
  %v25 = vadd.f32 %v23, %v24
  %v26 = vrot.slane %v25, 2
  %v27 = vadd.f32 %v25, %v26
  %v28 = vrot.slane %v27, 1
  %v29 = vadd.f32 %v27, %v28
  %v30 = vadd.f32 %v19, %v29
  %vm31 = vcmask 122880
  %32 = vst.msk [vmem:[%s1] sm:$0x1] %vm31, %v30
  %v33 = vld [vmem:[%s2] sm:$0x1]
  %v34 = vmul.f32 %v17, %v17
  %v35 = vmul.f32 %v18, %v18
  %v36 = vsel %vm20, %v34, 0.0
  %v37 = vsel %vm20, %v35, 0.0
  %v38 = vadd.f32 %v36, %v37
  %v39 = vrot.slane %v38, 4
  %v40 = vadd.f32 %v38, %v39
  %v41 = vrot.slane %v40, 2
  %v42 = vadd.f32 %v40, %v41
  %v43 = vrot.slane %v42, 1
  %v44 = vadd.f32 %v42, %v43
  %v45 = vadd.f32 %v33, %v44
  %46 = vst.msk [vmem:[%s2] sm:$0x1] %vm31, %v45
  // Predicated region
  $region10: #{critic_forward.2} parent=0 // pred_check
    _
  $region11: #{critic_forward.2} parent=0 // pred_check_branch
    %48 = sbr.rel (0) target = $region13
  $region12: #{critic_forward.2} parent=0 // pred_region
    _
  $region13: #{critic_forward.2} parent=0 // pred_fallthru
    _
  // Predicated region
  $region14: #{critic_forward.2} parent=0 // pred_check
    _
  $region15: #{critic_forward.2} parent=0 // pred_check_branch
    %50 = sbr.rel (0) target = $region17
  $region16: #{critic_forward.2} parent=0 // pred_region
    _
  $region17: #{critic_forward.2} parent=0 // pred_fallthru
    _
  // Predicated region
  $region18: #{critic_forward.2} parent=0 // pred_check
    _
  $region19: #{critic_forward.2} parent=0 // pred_check_branch
    %52 = sbr.rel (0) target = $region21
  $region20: #{critic_forward.2} parent=0 // pred_region
    _
  $region21: #{critic_forward.2} parent=0 // pred_fallthru
    _
  // Predicated region
  $region22: #{critic_forward.2} parent=0 // pred_check
    _
  $region23: #{critic_forward.2} parent=0 // pred_check_branch
    %54 = sbr.rel (0) target = $region25
  $region24: #{critic_forward.2} parent=0 // pred_region
    _
  $region25: #{critic_forward.2} parent=0 // pred_fallthru
    _

// kernel: critic_forward.3
$region0: #{critic_forward.3}
  #allocation0 [shape = 'u32[]', space=smem, size = 0x4, offset = 0x4, fixed_abs, tag = 'smem constant byte address 0x4 - core index']
  #allocation1 [shape = 'u32[144,128]{1,0:T(1,128)}', space=vmem, size = 0x12000, scoped, tag = 'internal scratch']
  #allocation2 [shape = 'f32[1,1]{1,0:T(1,128)S(1)}', space=vmem, size = 0x200, scoped, tag = 'scoped memory for critic_forward.3']
  %s0 = inlined_call_operand.vmem [shape: f32[16,16], index: 0, kind: input, shape index: {}]
  %s1 = inlined_call_operand.vmem [shape: f32[16,8], index: 1, kind: input, shape index: {}]
  %s2 = inlined_call_operand.vmem [shape: f32[1,16], index: 2, kind: input, shape index: {}]
  %s3 = inlined_call_operand.vmem [shape: f32[1,16], index: 3, kind: input, shape index: {}]
  %s4 = inlined_call_operand.vmem [shape: f32[1,16], index: 4, kind: input, shape index: {}]
  %s5 = inlined_call_operand.vmem [shape: f32[1,16], index: 5, kind: input, shape index: {}]
  %s6 = inlined_call_operand.vmem [shape: bf16[16,256], index: 6, kind: input, shape index: {}]
  %s7 = inlined_call_operand.vmem [shape: bf16[8,256], index: 7, kind: input, shape index: {}]
  %s8 = inlined_call_operand.vmem [shape: f32[1,256], index: 8, kind: input, shape index: {}]
  %s9 = inlined_call_operand.hbm [shape: bf16[256,128], index: 9, kind: input, shape index: {}]
  %s10 = inlined_call_operand.vmem [shape: f32[1,128], index: 10, kind: input, shape index: {}]
  %s11 = inlined_call_operand.vmem [shape: bf16[128,128], index: 11, kind: input, shape index: {}]
  %s12 = inlined_call_operand.vmem [shape: f32[1,128], index: 12, kind: input, shape index: {}]
  %s13 = inlined_call_operand.hbm [shape: bf16[128,128], index: 13, kind: input, shape index: {}]
  %s14 = inlined_call_operand.vmem [shape: f32[1,128], index: 14, kind: input, shape index: {}]
  %s15 = inlined_call_operand.vmem [shape: f32[1,128], index: 15, kind: input, shape index: {}]
  %s16 = inlined_call_operand.<no memory space> [shape: f32[1,1], index: 16, kind: input, shape index: {}]
  %s17 = inlined_call_operand.vmem [shape: f32[16,1], index: 17, kind: output, shape index: {}]
  %s18 = sld [smem:[#allocation0]]
  $region86: #{critic_forward.3} parent=0
    _
  %s20 = ssub.s32 1, %s18
  %s21 = scalar_select 0, %s20, %s18
  %v22 = vstv %s16
  %23 = vst [vmem:[#allocation2] sm:$0x1] %v22
  $region1: #{critic_forward.3} parent=0
    #allocation3 [shape = 'u8[65536]{0}', space=vmem, size = 0x10000, scoped, tag = 'input window, operand 9, single buffered']
    #allocation4 [shape = 's32[1]{0}', space=sflag, size = 0x4, scoped, tag = 'scoped memory for critic_forward.3']
    #allocation5 [shape = 'u8[32768]{0}', space=vmem, size = 0x8000, scoped, tag = 'input window, operand 13, single buffered']
    #allocation6 [shape = 's32[1]{0}', space=sflag, size = 0x4, scoped, tag = 'scoped memory for critic_forward.3']
    %24 = vsyncpa [#allocation4], 0
    %25 = vsyncpa [#allocation6], 0
    // Predicated region
    $region2: #{critic_forward.3} parent=1 // pred_check
      _
    $region3: #{critic_forward.3} parent=1 // pred_check_branch
      %27 = sbr.rel (0) target = $region5
    $region4: #{critic_forward.3} parent=1 // pred_region
      _
    $region5: #{critic_forward.3} parent=1 // pred_fallthru
      _
    // Predicated region
    $region6: #{critic_forward.3} parent=1 // pred_check
      _
    $region7: #{critic_forward.3} parent=1 // pred_check_branch
      %29 = sbr.rel (0) target = $region9
    $region8: #{critic_forward.3} parent=1 // pred_region
      _
    $region9: #{critic_forward.3} parent=1 // pred_fallthru
      _
    // Predicated region
    $region10: #{critic_forward.3} parent=1 // pred_check
      _
    $region11: #{critic_forward.3} parent=1 // pred_check_branch
      %31 = sbr.rel (0) target = $region13
    $region12: #{critic_forward.3} parent=1 // pred_region
      _
    $region13: #{critic_forward.3} parent=1 // pred_fallthru
      _
    // Predicated region
    $region14: #{critic_forward.3} parent=1 // pred_check
      _
    $region15: #{critic_forward.3} parent=1 // pred_check_branch
      %33 = sbr.rel (0) target = $region17
    $region16: #{critic_forward.3} parent=1 // pred_region
      _
    $region17: #{critic_forward.3} parent=1 // pred_fallthru
      _
    // Predicated region
    $region18: #{critic_forward.3} parent=1 // pred_check
      _
    $region19: #{critic_forward.3} parent=1 // pred_check_branch
      %35 = sbr.rel (0) target = $region21
    $region20: #{critic_forward.3} parent=1 // pred_region
      _
    $region21: #{critic_forward.3} parent=1 // pred_fallthru
      _
    // Predicated region
    $region22: #{critic_forward.3} parent=1 // pred_check
      _
    $region23: #{critic_forward.3} parent=1 // pred_check_branch
      %37 = sbr.rel (0) target = $region25
    $region24: #{critic_forward.3} parent=1 // pred_region
      _
    $region25: #{critic_forward.3} parent=1 // pred_fallthru
      _
    // Predicated region
    $region26: #{critic_forward.3} parent=1 // pred_check
      _
    $region27: #{critic_forward.3} parent=1 // pred_check_branch
      %39 = sbr.rel (0) target = $region29
    $region28: #{critic_forward.3} parent=1 // pred_region
      _
    $region29: #{critic_forward.3} parent=1 // pred_fallthru
      _
    // Predicated region
    $region30: #{critic_forward.3} parent=1 // pred_check
      _
    $region31: #{critic_forward.3} parent=1 // pred_check_branch
      %41 = sbr.rel (0) target = $region33
    $region32: #{critic_forward.3} parent=1 // pred_region
      _
    $region33: #{critic_forward.3} parent=1 // pred_fallthru
      _
    // Predicated region
    $region34: #{critic_forward.3} parent=1 // pred_check
      _
    $region35: #{critic_forward.3} parent=1 // pred_check_branch
      %43 = sbr.rel (0) target = $region37
    $region36: #{critic_forward.3} parent=1 // pred_region
      _
    $region37: #{critic_forward.3} parent=1 // pred_fallthru
      _
    // Predicated region
    $region38: #{critic_forward.3} parent=1 // pred_check
      _
    $region39: #{critic_forward.3} parent=1 // pred_check_branch
      %45 = sbr.rel (0) target = $region41
    $region40: #{critic_forward.3} parent=1 // pred_region
      %s47 = ssub.s32 2048, 2048
      %48 = vsyncadd [#allocation4], %s47
      %s49 = sshll.u32 [#allocation3], 4
      %s50 = int_to_ptr.vmem [resolvable:$true] %s49
      %55 = dma.hbm_to_vmem [thread:$0]  %s9, 2048, %s50, [#allocation4], 64, 64, 4
    $region41: #{critic_forward.3} parent=1 // pred_fallthru
      _
    // Predicated region
    $region42: #{critic_forward.3} parent=1 // pred_check
      _
    $region43: #{critic_forward.3} parent=1 // pred_check_branch
      %57 = sbr.rel (0) target = $region45
    $region44: #{critic_forward.3} parent=1 // pred_region
      _
    $region45: #{critic_forward.3} parent=1 // pred_fallthru
      _
    // Predicated region
    $region46: #{critic_forward.3} parent=1 // pred_check
      _
    $region47: #{critic_forward.3} parent=1 // pred_check_branch
      %59 = sbr.rel (0) target = $region49
    $region48: #{critic_forward.3} parent=1 // pred_region
      _
    $region49: #{critic_forward.3} parent=1 // pred_fallthru
      _
    // Predicated region
    $region50: #{critic_forward.3} parent=1 // pred_check
      _
    $region51: #{critic_forward.3} parent=1 // pred_check_branch
      %61 = sbr.rel (0) target = $region53
    $region52: #{critic_forward.3} parent=1 // pred_region
      _
    $region53: #{critic_forward.3} parent=1 // pred_fallthru
      _
    // Predicated region
    $region54: #{critic_forward.3} parent=1 // pred_check
      _
    $region55: #{critic_forward.3} parent=1 // pred_check_branch
      %63 = sbr.rel (0) target = $region57
    $region56: #{critic_forward.3} parent=1 // pred_region
      %s65 = ssub.s32 1024, 1024
      %66 = vsyncadd [#allocation6], %s65
      %s67 = sshll.u32 [#allocation5], 4
      %s68 = int_to_ptr.vmem [resolvable:$true] %s67
      %73 = dma.hbm_to_vmem [thread:$0]  %s13, 1024, %s68, [#allocation6], 64, 64, 4
    $region57: #{critic_forward.3} parent=1 // pred_fallthru
      _
    // Predicated region
    $region58: #{critic_forward.3} parent=1 // pred_check
      _
    $region59: #{critic_forward.3} parent=1 // pred_check_branch
      %75 = sbr.rel (0) target = $region61
    $region60: #{critic_forward.3} parent=1 // pred_region
      _
    $region61: #{critic_forward.3} parent=1 // pred_fallthru
      _
    // Predicated region
    $region62: #{critic_forward.3} parent=1 // pred_check
      _
    $region63: #{critic_forward.3} parent=1 // pred_check_branch
      %77 = sbr.rel (0) target = $region65
    $region64: #{critic_forward.3} parent=1 // pred_region
      _
    $region65: #{critic_forward.3} parent=1 // pred_fallthru
      _
    // Predicated region
    $region66: #{critic_forward.3} parent=1 // pred_check
      _
    $region67: #{critic_forward.3} parent=1 // pred_check_branch
      %79 = sbr.rel (0) target = $region69
    $region68: #{critic_forward.3} parent=1 // pred_region
      _
    $region69: #{critic_forward.3} parent=1 // pred_fallthru
      _
    // Predicated region
    $region70: #{critic_forward.3} parent=1 // pred_check
      _
    $region71: #{critic_forward.3} parent=1 // pred_check_branch
      %81 = sbr.rel (0) target = $region73
    $region72: #{critic_forward.3} parent=1 // pred_region
      %82 = dma.done [#allocation4], 2048
    $region73: #{critic_forward.3} parent=1 // pred_fallthru
      _
    // Predicated region
    $region74: #{critic_forward.3} parent=1 // pred_check
      _
    $region75: #{critic_forward.3} parent=1 // pred_check_branch
      %84 = sbr.rel (0) target = $region77
    $region76: #{critic_forward.3} parent=1 // pred_region
      %85 = dma.done [#allocation6], 1024
    $region77: #{critic_forward.3} parent=1 // pred_fallthru
      _
    %v87 = vld [vmem:[%s2] sm:$0x1]
    %v88 = vmul.f32 %v87, 0.125
    %v89 = vld [vmem:[%s3] sm:$0x1]
    %v90 = vmul.f32 %v89, 0.125
    %v91 = vmul.f32 %v88, %v88
    %v92 = vsub.f32 %v90, %v91
    %v93 = vmax.f32 %v92, 0.0
    %v94 = vld [vmem:[%s4] sm:$0x1]
    %v95 = vadd.f32 %v93, 1e-05
    %v96 = vrsqrt.pop %v95
    %v97 = vmul.f32 %v94, %v96
    %v98 = vld [vmem:[%s5] sm:$0x1]
    %v99 = vmul.f32 %v88, %v97
    %v100 = vsub.f32 %v98, %v99
    %v101 = vld [vmem:[%s0] sm:$0xff]
    %v102 = vld [vmem:[%s0 + $0x8] sm:$0xff]
    %v104 = vlaneseq
    %v105 = vshrl.u32 %v104, 7
    %v106 = vsub.s32 0, %v105
    %v107 = vrot.slane %v97, %v106
    %v109 = vmul.f32 %v101, %v107
    %v110 = vmul.f32 %v102, %v107
    %v112 = vlaneseq
    %v113 = vshrl.u32 %v112, 7
    %v114 = vsub.s32 0, %v113
    %v115 = vrot.slane %v100, %v114
    %v117 = vadd.f32 %v109, %v115
    %v118 = vadd.f32 %v110, %v115
    %v119 = vpack.c.bf16 %v118, %v117
    %v120 = vld [vmem:[%s1] sm:$0xff]
    %v121 = vld [vmem:[%s1 + $0x8] sm:$0xff]
    %v122 = vpack.c.bf16 %v121, %v120
    %v123 = vld [vmem:[%s6] sm:$0xff]
    %v124 = vld [vmem:[%s6 + $0x8] sm:$0xff]
    %v125 = vld [vmem:[%s7] sm:$0xff]
    %v127 = vunpack.c.l.b16 %v125
    %v128 = vunpack.c.h.b16 %v125
    %v129 = vpack.c.b16 %v127, %v127
    %v130 = vpack.c.b16 %v128, %v128
    %vm131 = vcmask 64512
    %v133 = vsel %vm131, %v122, 0
    %vm135 = vcmask 1043456
    %v137 = vsel %vm135, %v129, 0
    %v140 = vsel %vm135, %v130, 0
    %142 = vmatprep.subr.bf16.mxu0 %v140
    %143 = vmatpush1.bf16.msra.mxu0 %v137
    %144 = vmatprep.subr.bf16.mxu0 0
    %145 = vmatpush1.bf16.msra.mxu0 0
    %146 = vmatprep.subr.bf16.mxu0 0
    %147 = vmatpush1.bf16.msra.mxu0 0
    %148 = vmatprep.subr.bf16.mxu0 0
    %149 = vmatpush1.bf16.msra.mxu0 0
    %150 = vmatprep.subr.bf16.mxu0 0
    %151 = vmatpush1.bf16.msra.mxu0 0
    %152 = vmatprep.subr.bf16.mxu0 0
    %153 = vmatpush1.bf16.msra.mxu0 0
    %154 = vmatprep.subr.bf16.mxu0 0
    %155 = vmatpush1.bf16.msra.mxu0 0
    %156 = vmatprep.subr.bf16.mxu0 0
    %157 = vmatpush1.bf16.msra.mxu0 0
    %158 = vmatprep.subr.bf16.mxu0 0
    %159 = vmatpush1.bf16.msra.mxu0 0
    %160 = vmatprep.subr.bf16.mxu0 0
    %161 = vmatpush1.bf16.msra.mxu0 0
    %162 = vmatprep.subr.bf16.mxu0 0
    %163 = vmatpush1.bf16.msra.mxu0 0
    %164 = vmatprep.subr.bf16.mxu0 0
    %165 = vmatpush1.bf16.msra.mxu0 0
    %166 = vmatprep.subr.bf16.mxu0 0
    %167 = vmatpush1.bf16.msra.mxu0 0
    %168 = vmatprep.subr.bf16.mxu0 0
    %169 = vmatpush1.bf16.msra.mxu0 0
    %170 = vmatprep.subr.bf16.mxu0 0
    %171 = vmatpush1.bf16.msra.mxu0 0
    %172 = vmatprep.subr.bf16.mxu0 0
    %173 = vmatpush1.bf16.msra.mxu0 0
    %174 = vmatprep.mubr.bf16.mxu0 0
    %175 = vmatmul.mubr.bf16.gmra.mrb[0].mxu0 %v133
    %v176 = vpop.f32.mrb[0].mxu0
    %v177 = vadd.f32 0.0, %v176
    %v178 = vpop.f32.mrb[0].mxu0
    %v179 = vadd.f32 0.0, %v178
    %v180 = vpop.f32.mrb[0].mxu0
    %v181 = vadd.f32 0.0, %v180
    %v182 = vpop.f32.mrb[0].mxu0
    %v183 = vadd.f32 0.0, %v182
    %184 = vdwg.mxu0
    %v187 = vunpack.c.l.b16 %v123
    %v188 = vunpack.c.h.b16 %v123
    %v189 = vunpack.c.l.b16 %v124
    %v190 = vunpack.c.h.b16 %v124
    %v191 = vpack.c.b16 %v189, %v187
    %v192 = vpack.c.b16 %v190, %v188
    %vm195 = vcmask 130048
    %v197 = vsel %vm195, %v119, 0
    %199 = vmatprep.subr.bf16.mxu0 %v192
    %200 = vmatpush1.bf16.msra.mxu0 %v191
    %201 = vmatprep.subr.bf16.mxu0 0
    %202 = vmatpush1.bf16.msra.mxu0 0
    %203 = vmatprep.subr.bf16.mxu0 0
    %204 = vmatpush1.bf16.msra.mxu0 0
    %205 = vmatprep.subr.bf16.mxu0 0
    %206 = vmatpush1.bf16.msra.mxu0 0
    %207 = vmatprep.subr.bf16.mxu0 0
    %208 = vmatpush1.bf16.msra.mxu0 0
    %209 = vmatprep.subr.bf16.mxu0 0
    %210 = vmatpush1.bf16.msra.mxu0 0
    %211 = vmatprep.subr.bf16.mxu0 0
    %212 = vmatpush1.bf16.msra.mxu0 0
    %213 = vmatprep.subr.bf16.mxu0 0
    %214 = vmatpush1.bf16.msra.mxu0 0
    %215 = vmatprep.subr.bf16.mxu0 0
    %216 = vmatpush1.bf16.msra.mxu0 0
    %217 = vmatprep.subr.bf16.mxu0 0
    %218 = vmatpush1.bf16.msra.mxu0 0
    %219 = vmatprep.subr.bf16.mxu0 0
    %220 = vmatpush1.bf16.msra.mxu0 0
    %221 = vmatprep.subr.bf16.mxu0 0
    %222 = vmatpush1.bf16.msra.mxu0 0
    %223 = vmatprep.subr.bf16.mxu0 0
    %224 = vmatpush1.bf16.msra.mxu0 0
    %225 = vmatprep.subr.bf16.mxu0 0
    %226 = vmatpush1.bf16.msra.mxu0 0
    %227 = vmatprep.subr.bf16.mxu0 0
    %228 = vmatpush1.bf16.msra.mxu0 0
    %229 = vmatprep.subr.bf16.mxu0 0
    %230 = vmatpush1.bf16.msra.mxu0 0
    %231 = vmatprep.mubr.bf16.mxu0 0
    %232 = vmatmul.mubr.bf16.gmra.mrb[0].mxu0 %v197
    %v233 = vpop.f32.mrb[0].mxu0
    %v234 = vadd.f32 %v177, %v233
    %v235 = vpop.f32.mrb[0].mxu0
    %v236 = vadd.f32 %v179, %v235
    %v237 = vpop.f32.mrb[0].mxu0
    %v238 = vadd.f32 %v181, %v237
    %v239 = vpop.f32.mrb[0].mxu0
    %v240 = vadd.f32 %v183, %v239
    %241 = vdwg.mxu0
    %v242 = vld [vmem:[%s8] sm:$0x3]
    %v244 = vlaneseq
    %v245 = vshrl.u32 %v244, 7
    %v246 = vsub.s32 0, %v245
    %v247 = vrot.slane %v242, %v246
    %v248 = vlaneseq
    %v249 = vshrl.u32 %v248, 7
    %v250 = vsub.s32 1, %v249
    %v251 = vrot.slane %v242, %v250
    %v254 = vadd.f32 %v234, %v247
    %v255 = vadd.f32 %v236, %v251
    %v256 = vadd.f32 %v238, %v247
    %v257 = vadd.f32 %v240, %v251
    %v258 = vmax.f32 %v254, 0.0
    %v259 = vmax.f32 %v255, 0.0
    %v260 = vmax.f32 %v256, 0.0
    %v261 = vmax.f32 %v257, 0.0
    %v262 = vpack.c.bf16 %v260, %v258
    %v263 = vpack.c.bf16 %v261, %v259
    %v264 = vld [vmem:[#allocation3] sm:$0xf]
    %v265 = vld [vmem:[#allocation3 + $0x4] sm:$0xf]
    %v266 = vld [vmem:[#allocation3 + $0x8] sm:$0xf]
    %v267 = vld [vmem:[#allocation3 + $0xc] sm:$0xf]
    %v268 = vld [vmem:[#allocation3 + $0x10] sm:$0xf]
    %v269 = vld [vmem:[#allocation3 + $0x14] sm:$0xf]
    %v270 = vld [vmem:[#allocation3 + $0x18] sm:$0xf]
    %v271 = vld [vmem:[#allocation3 + $0x1c] sm:$0xf]
    %v272 = vld [vmem:[#allocation3 + $0x20] sm:$0xf]
    %v273 = vld [vmem:[#allocation3 + $0x24] sm:$0xf]
    %v274 = vld [vmem:[#allocation3 + $0x28] sm:$0xf]
    %v275 = vld [vmem:[#allocation3 + $0x2c] sm:$0xf]
    %v276 = vld [vmem:[#allocation3 + $0x30] sm:$0xf]
    %v277 = vld [vmem:[#allocation3 + $0x34] sm:$0xf]
    %v278 = vld [vmem:[#allocation3 + $0x38] sm:$0xf]
    %v279 = vld [vmem:[#allocation3 + $0x3c] sm:$0xf]
    %v280 = vld [vmem:[#allocation3 + $0x40] sm:$0xf]
    %v281 = vld [vmem:[#allocation3 + $0x44] sm:$0xf]
    %v282 = vld [vmem:[#allocation3 + $0x48] sm:$0xf]
    %v283 = vld [vmem:[#allocation3 + $0x4c] sm:$0xf]
    %v284 = vld [vmem:[#allocation3 + $0x50] sm:$0xf]
    %v285 = vld [vmem:[#allocation3 + $0x54] sm:$0xf]
    %v286 = vld [vmem:[#allocation3 + $0x58] sm:$0xf]
    %v287 = vld [vmem:[#allocation3 + $0x5c] sm:$0xf]
    %v288 = vld [vmem:[#allocation3 + $0x60] sm:$0xf]
    %v289 = vld [vmem:[#allocation3 + $0x64] sm:$0xf]
    %v290 = vld [vmem:[#allocation3 + $0x68] sm:$0xf]
    %v291 = vld [vmem:[#allocation3 + $0x6c] sm:$0xf]
    %v292 = vld [vmem:[#allocation3 + $0x70] sm:$0xf]
    %v293 = vld [vmem:[#allocation3 + $0x74] sm:$0xf]
    %v294 = vld [vmem:[#allocation3 + $0x78] sm:$0xf]
    %v295 = vld [vmem:[#allocation3 + $0x7c] sm:$0xf]
    %v296 = vld [vmem:[%s10] sm:$0x1]
    %v298 = vlaneseq
    %v299 = vshrl.u32 %v298, 7
    %v300 = vsub.s32 0, %v299
    %v301 = vrot.slane %v296, %v300
    %v335 = vunpack.c.l.b16 %v264
    %v336 = vunpack.c.l.b16 %v265
    %v337 = vunpack.c.l.b16 %v266
    %v338 = vunpack.c.l.b16 %v267
    %v339 = vunpack.c.l.b16 %v268
    %v340 = vunpack.c.l.b16 %v269
    %v341 = vunpack.c.l.b16 %v270
    %v342 = vunpack.c.l.b16 %v271
    %v343 = vunpack.c.l.b16 %v272
    %v344 = vunpack.c.l.b16 %v273
    %v345 = vunpack.c.l.b16 %v274
    %v346 = vunpack.c.l.b16 %v275
    %v347 = vunpack.c.l.b16 %v276
    %v348 = vunpack.c.l.b16 %v277
    %v349 = vunpack.c.l.b16 %v278
    %v350 = vunpack.c.l.b16 %v279
    %v351 = vunpack.c.l.b16 %v280
    %v352 = vunpack.c.l.b16 %v281
    %v353 = vunpack.c.l.b16 %v282
    %v354 = vunpack.c.l.b16 %v283
    %v355 = vunpack.c.l.b16 %v284
    %v356 = vunpack.c.l.b16 %v285
    %v357 = vunpack.c.l.b16 %v286
    %v358 = vunpack.c.l.b16 %v287
    %v359 = vunpack.c.l.b16 %v288
    %v360 = vunpack.c.l.b16 %v289
    %v361 = vunpack.c.l.b16 %v290
    %v362 = vunpack.c.l.b16 %v291
    %v363 = vunpack.c.l.b16 %v292
    %v364 = vunpack.c.l.b16 %v293
    %v365 = vunpack.c.l.b16 %v294
    %v366 = vunpack.c.l.b16 %v295
    %v367 = vpack.c.b16 %v336, %v335
    %v368 = vpack.c.b16 %v338, %v337
    %v369 = vpack.c.b16 %v340, %v339
    %v370 = vpack.c.b16 %v342, %v341
    %v371 = vpack.c.b16 %v344, %v343
    %v372 = vpack.c.b16 %v346, %v345
    %v373 = vpack.c.b16 %v348, %v347
    %v374 = vpack.c.b16 %v350, %v349
    %v375 = vpack.c.b16 %v352, %v351
    %v376 = vpack.c.b16 %v354, %v353
    %v377 = vpack.c.b16 %v356, %v355
    %v378 = vpack.c.b16 %v358, %v357
    %v379 = vpack.c.b16 %v360, %v359
    %v380 = vpack.c.b16 %v362, %v361
    %v381 = vpack.c.b16 %v364, %v363
    %v382 = vpack.c.b16 %v366, %v365
    %399 = vmatprep.subr.bf16.mxu0 0
    %400 = vmatpush1.bf16.msra.mxu0 %v367
    %401 = vmatprep.subr.bf16.mxu0 0
    %402 = vmatpush1.bf16.msra.mxu0 %v368
    %403 = vmatprep.subr.bf16.mxu0 0
    %404 = vmatpush1.bf16.msra.mxu0 %v369
    %405 = vmatprep.subr.bf16.mxu0 0
    %406 = vmatpush1.bf16.msra.mxu0 %v370
    %407 = vmatprep.subr.bf16.mxu0 0
    %408 = vmatpush1.bf16.msra.mxu0 %v371
    %409 = vmatprep.subr.bf16.mxu0 0
    %410 = vmatpush1.bf16.msra.mxu0 %v372
    %411 = vmatprep.subr.bf16.mxu0 0
    %412 = vmatpush1.bf16.msra.mxu0 %v373
    %413 = vmatprep.subr.bf16.mxu0 0
    %414 = vmatpush1.bf16.msra.mxu0 %v374
    %415 = vmatprep.subr.bf16.mxu0 0
    %416 = vmatpush1.bf16.msra.mxu0 %v375
    %417 = vmatprep.subr.bf16.mxu0 0
    %418 = vmatpush1.bf16.msra.mxu0 %v376
    %419 = vmatprep.subr.bf16.mxu0 0
    %420 = vmatpush1.bf16.msra.mxu0 %v377
    %421 = vmatprep.subr.bf16.mxu0 0
    %422 = vmatpush1.bf16.msra.mxu0 %v378
    %423 = vmatprep.subr.bf16.mxu0 0
    %424 = vmatpush1.bf16.msra.mxu0 %v379
    %425 = vmatprep.subr.bf16.mxu0 0
    %426 = vmatpush1.bf16.msra.mxu0 %v380
    %427 = vmatprep.subr.bf16.mxu0 0
    %428 = vmatpush1.bf16.msra.mxu0 %v381
    %429 = vmatprep.subr.bf16.mxu0 0
    %430 = vmatpush1.bf16.msra.mxu0 %v382
    %431 = vmatprep.mubr.bf16.mxu0 %v263
    %432 = vmatmul.mubr.bf16.gmra.mrb[0].mxu0 %v262
    %v433 = vpop.f32.mrb[0].mxu0
    %v434 = vadd.f32 %v301, %v433
    %v435 = vpop.f32.mrb[0].mxu0
    %v436 = vpop.f32.mrb[0].mxu0
    %v437 = vadd.f32 %v301, %v436
    %v438 = vpop.f32.mrb[0].mxu0
    %439 = vdwg.mxu0
    %v440 = vmax.f32 %v434, 0.0
    %v441 = vmax.f32 %v437, 0.0
    %v442 = vpack.c.bf16 %v441, %v440
    %v443 = vld [vmem:[%s11] sm:$0xf]
    %v444 = vld [vmem:[%s11 + $0x4] sm:$0xf]
    %v445 = vld [vmem:[%s11 + $0x8] sm:$0xf]
    %v446 = vld [vmem:[%s11 + $0xc] sm:$0xf]
    %v447 = vld [vmem:[%s11 + $0x10] sm:$0xf]
    %v448 = vld [vmem:[%s11 + $0x14] sm:$0xf]
    %v449 = vld [vmem:[%s11 + $0x18] sm:$0xf]
    %v450 = vld [vmem:[%s11 + $0x1c] sm:$0xf]
    %v451 = vld [vmem:[%s11 + $0x20] sm:$0xf]
    %v452 = vld [vmem:[%s11 + $0x24] sm:$0xf]
    %v453 = vld [vmem:[%s11 + $0x28] sm:$0xf]
    %v454 = vld [vmem:[%s11 + $0x2c] sm:$0xf]
    %v455 = vld [vmem:[%s11 + $0x30] sm:$0xf]
    %v456 = vld [vmem:[%s11 + $0x34] sm:$0xf]
    %v457 = vld [vmem:[%s11 + $0x38] sm:$0xf]
    %v458 = vld [vmem:[%s11 + $0x3c] sm:$0xf]
    %v459 = vld [vmem:[%s12] sm:$0x1]
    %v461 = vlaneseq
    %v462 = vshrl.u32 %v461, 7
    %v463 = vsub.s32 0, %v462
    %v464 = vrot.slane %v459, %v463
    %v482 = vunpack.c.l.b16 %v443
    %v483 = vunpack.c.l.b16 %v444
    %v484 = vunpack.c.l.b16 %v445
    %v485 = vunpack.c.l.b16 %v446
    %v486 = vunpack.c.l.b16 %v447
    %v487 = vunpack.c.l.b16 %v448
    %v488 = vunpack.c.l.b16 %v449
    %v489 = vunpack.c.l.b16 %v450
    %v490 = vunpack.c.l.b16 %v451
    %v491 = vunpack.c.l.b16 %v452
    %v492 = vunpack.c.l.b16 %v453
    %v493 = vunpack.c.l.b16 %v454
    %v494 = vunpack.c.l.b16 %v455
    %v495 = vunpack.c.l.b16 %v456
    %v496 = vunpack.c.l.b16 %v457
    %v497 = vunpack.c.l.b16 %v458
    %v498 = vpack.c.b16 %v483, %v482
    %v499 = vpack.c.b16 %v485, %v484
    %v500 = vpack.c.b16 %v487, %v486
    %v501 = vpack.c.b16 %v489, %v488
    %v502 = vpack.c.b16 %v491, %v490
    %v503 = vpack.c.b16 %v493, %v492
    %v504 = vpack.c.b16 %v495, %v494
    %v505 = vpack.c.b16 %v497, %v496
    %514 = vmatprep.subr.bf16.mxu0 0
    %515 = vmatpush1.bf16.msra.mxu0 %v498
    %516 = vmatprep.subr.bf16.mxu0 0
    %517 = vmatpush1.bf16.msra.mxu0 %v499
    %518 = vmatprep.subr.bf16.mxu0 0
    %519 = vmatpush1.bf16.msra.mxu0 %v500
    %520 = vmatprep.subr.bf16.mxu0 0
    %521 = vmatpush1.bf16.msra.mxu0 %v501
    %522 = vmatprep.subr.bf16.mxu0 0
    %523 = vmatpush1.bf16.msra.mxu0 %v502
    %524 = vmatprep.subr.bf16.mxu0 0
    %525 = vmatpush1.bf16.msra.mxu0 %v503
    %526 = vmatprep.subr.bf16.mxu0 0
    %527 = vmatpush1.bf16.msra.mxu0 %v504
    %528 = vmatprep.subr.bf16.mxu0 0
    %529 = vmatpush1.bf16.msra.mxu0 %v505
    %530 = vmatprep.subr.bf16.mxu0 0
    %531 = vmatpush1.bf16.msra.mxu0 0
    %532 = vmatprep.subr.bf16.mxu0 0
    %533 = vmatpush1.bf16.msra.mxu0 0
    %534 = vmatprep.subr.bf16.mxu0 0
    %535 = vmatpush1.bf16.msra.mxu0 0
    %536 = vmatprep.subr.bf16.mxu0 0
    %537 = vmatpush1.bf16.msra.mxu0 0
    %538 = vmatprep.subr.bf16.mxu0 0
    %539 = vmatpush1.bf16.msra.mxu0 0
    %540 = vmatprep.subr.bf16.mxu0 0
    %541 = vmatpush1.bf16.msra.mxu0 0
    %542 = vmatprep.subr.bf16.mxu0 0
    %543 = vmatpush1.bf16.msra.mxu0 0
    %544 = vmatprep.subr.bf16.mxu0 0
    %545 = vmatpush1.bf16.msra.mxu0 0
    %546 = vmatprep.mubr.bf16.mxu0 0
    %547 = vmatmul.mubr.bf16.gmra.mrb[0].mxu0 %v442
    %v548 = vpop.f32.mrb[0].mxu0
    %v549 = vadd.f32 %v464, %v548
    %v550 = vpop.f32.mrb[0].mxu0
    %v551 = vpop.f32.mrb[0].mxu0
    %v552 = vadd.f32 %v464, %v551
    %v553 = vpop.f32.mrb[0].mxu0
    %554 = vdwg.mxu0
    %v555 = vmax.f32 %v549, 0.0
    %v556 = vmax.f32 %v552, 0.0
    %v557 = vpack.c.bf16 %v556, %v555
    %v558 = vld [vmem:[#allocation5] sm:$0xf]
    %v559 = vld [vmem:[#allocation5 + $0x4] sm:$0xf]
    %v560 = vld [vmem:[#allocation5 + $0x8] sm:$0xf]
    %v561 = vld [vmem:[#allocation5 + $0xc] sm:$0xf]
    %v562 = vld [vmem:[#allocation5 + $0x10] sm:$0xf]
    %v563 = vld [vmem:[#allocation5 + $0x14] sm:$0xf]
    %v564 = vld [vmem:[#allocation5 + $0x18] sm:$0xf]
    %v565 = vld [vmem:[#allocation5 + $0x1c] sm:$0xf]
    %v566 = vld [vmem:[#allocation5 + $0x20] sm:$0xf]
    %v567 = vld [vmem:[#allocation5 + $0x24] sm:$0xf]
    %v568 = vld [vmem:[#allocation5 + $0x28] sm:$0xf]
    %v569 = vld [vmem:[#allocation5 + $0x2c] sm:$0xf]
    %v570 = vld [vmem:[#allocation5 + $0x30] sm:$0xf]
    %v571 = vld [vmem:[#allocation5 + $0x34] sm:$0xf]
    %v572 = vld [vmem:[#allocation5 + $0x38] sm:$0xf]
    %v573 = vld [vmem:[#allocation5 + $0x3c] sm:$0xf]
    %v574 = vld [vmem:[%s14] sm:$0x1]
    %v576 = vlaneseq
    %v577 = vshrl.u32 %v576, 7
    %v578 = vsub.s32 0, %v577
    %v579 = vrot.slane %v574, %v578
    %v597 = vunpack.c.l.b16 %v558
    %v598 = vunpack.c.l.b16 %v559
    %v599 = vunpack.c.l.b16 %v560
    %v600 = vunpack.c.l.b16 %v561
    %v601 = vunpack.c.l.b16 %v562
    %v602 = vunpack.c.l.b16 %v563
    %v603 = vunpack.c.l.b16 %v564
    %v604 = vunpack.c.l.b16 %v565
    %v605 = vunpack.c.l.b16 %v566
    %v606 = vunpack.c.l.b16 %v567
    %v607 = vunpack.c.l.b16 %v568
    %v608 = vunpack.c.l.b16 %v569
    %v609 = vunpack.c.l.b16 %v570
    %v610 = vunpack.c.l.b16 %v571
    %v611 = vunpack.c.l.b16 %v572
    %v612 = vunpack.c.l.b16 %v573
    %v613 = vpack.c.b16 %v598, %v597
    %v614 = vpack.c.b16 %v600, %v599
    %v615 = vpack.c.b16 %v602, %v601
    %v616 = vpack.c.b16 %v604, %v603
    %v617 = vpack.c.b16 %v606, %v605
    %v618 = vpack.c.b16 %v608, %v607
    %v619 = vpack.c.b16 %v610, %v609
    %v620 = vpack.c.b16 %v612, %v611
    %629 = vmatprep.subr.bf16.mxu0 0
    %630 = vmatpush1.bf16.msra.mxu0 %v613
    %631 = vmatprep.subr.bf16.mxu0 0
    %632 = vmatpush1.bf16.msra.mxu0 %v614
    %633 = vmatprep.subr.bf16.mxu0 0
    %634 = vmatpush1.bf16.msra.mxu0 %v615
    %635 = vmatprep.subr.bf16.mxu0 0
    %636 = vmatpush1.bf16.msra.mxu0 %v616
    %637 = vmatprep.subr.bf16.mxu0 0
    %638 = vmatpush1.bf16.msra.mxu0 %v617
    %639 = vmatprep.subr.bf16.mxu0 0
    %640 = vmatpush1.bf16.msra.mxu0 %v618
    %641 = vmatprep.subr.bf16.mxu0 0
    %642 = vmatpush1.bf16.msra.mxu0 %v619
    %643 = vmatprep.subr.bf16.mxu0 0
    %644 = vmatpush1.bf16.msra.mxu0 %v620
    %645 = vmatprep.subr.bf16.mxu0 0
    %646 = vmatpush1.bf16.msra.mxu0 0
    %647 = vmatprep.subr.bf16.mxu0 0
    %648 = vmatpush1.bf16.msra.mxu0 0
    %649 = vmatprep.subr.bf16.mxu0 0
    %650 = vmatpush1.bf16.msra.mxu0 0
    %651 = vmatprep.subr.bf16.mxu0 0
    %652 = vmatpush1.bf16.msra.mxu0 0
    %653 = vmatprep.subr.bf16.mxu0 0
    %654 = vmatpush1.bf16.msra.mxu0 0
    %655 = vmatprep.subr.bf16.mxu0 0
    %656 = vmatpush1.bf16.msra.mxu0 0
    %657 = vmatprep.subr.bf16.mxu0 0
    %658 = vmatpush1.bf16.msra.mxu0 0
    %659 = vmatprep.subr.bf16.mxu0 0
    %660 = vmatpush1.bf16.msra.mxu0 0
    %661 = vmatprep.mubr.bf16.mxu0 0
    %662 = vmatmul.mubr.bf16.gmra.mrb[0].mxu0 %v557
    %v663 = vpop.f32.mrb[0].mxu0
    %v664 = vadd.f32 %v579, %v663
    %v665 = vpop.f32.mrb[0].mxu0
    %v666 = vpop.f32.mrb[0].mxu0
    %v667 = vadd.f32 %v579, %v666
    %v668 = vpop.f32.mrb[0].mxu0
    %669 = vdwg.mxu0
    %v670 = vmax.f32 %v664, 0.0
    %v671 = vmax.f32 %v667, 0.0
    %v672 = vld [vmem:[%s15] sm:$0x1]
    %v674 = vlaneseq
    %v675 = vshrl.u32 %v674, 7
    %v676 = vsub.s32 0, %v675
    %v677 = vrot.slane %v672, %v676
    %v679 = vmul.f32 %v670, %v677
    %v680 = vmul.f32 %v671, %v677
    %681 = vadd.xlane.f32.xlu0 %v679
    %v682 = vpop.xlane.xlu0 %681
    %683 = vadd.xlane.f32.xlu0 %v680
    %v684 = vpop.xlane.xlu0 %683
    %v685 = vld [vmem:[#allocation2] sm:$0x1]
    %v687 = vlaneseq
    %v688 = vshrl.u32 %v687, 7
    %v689 = vsub.s32 0, %v688
    %v690 = vrot.slane %v685, %v689
    %v692 = vadd.f32 %v682, %v690
    %v693 = vadd.f32 %v684, %v690
    %vm694 = vcmask 7168
    %695 = vst.msk [vmem:[%s17] sm:$0xff] %vm694, %v692
    %696 = vst.msk [vmem:[%s17 + $0x8] sm:$0xff] %vm694, %v693
    // Predicated region
    $region78: #{critic_forward.3} parent=1 // pred_check
      _
    $region79: #{critic_forward.3} parent=1 // pred_check_branch
      %698 = sbr.rel (0) target = $region81
    $region80: #{critic_forward.3} parent=1 // pred_region
      _
    $region81: #{critic_forward.3} parent=1 // pred_fallthru
      _
    // Predicated region
    $region82: #{critic_forward.3} parent=1 // pred_check
      _
    $region83: #{critic_forward.3} parent=1 // pred_check_branch
      %700 = sbr.rel (0) target = $region85
    $region84: #{critic_forward.3} parent=1 // pred_region
      _
    $region85: #{critic_forward.3} parent=1 // pred_fallthru
      _
    %701 = vsyncpa [#allocation4], 1
    %702 = vsyncpa [#allocation6], 1

</llo_original>
